<compile_context>
chip_gen: v7x
topology: tpu7x:2x2x1
jax: 0.10.0
libtpu: 0.0.40
codegen_flags: <defaults>
</compile_context>

<pallas_src>
import jax
import jax.numpy as jnp
from jax.experimental import pallas as pl
from jax.experimental.pallas import tpu as pltpu


_NEG_INF = -1e30  # finite "minus infinity": masks padded class columns without NaNs


def _round_up(x, m):
    return (x + m - 1) // m * m


def _bspec(shape, index_map, *, buffers=None):
    """BlockSpec helper; requests an explicit buffer count when supported."""
    if buffers is not None:
        try:
            return pl.BlockSpec(shape, index_map, pipeline_mode=pl.Buffered(buffers))
        except (TypeError, AttributeError):
            pass
    return pl.BlockSpec(shape, index_map)


def _vmem_capacity_bytes():
    try:
        cap = int(pltpu.get_tpu_info().vmem_capacity_bytes)
        if cap > 0:
            return cap
    except Exception:
        pass
    return 64 << 20  # conservative fallback (v7x per-TC VMEM)


def _xw_kernel(x_ref, w_ref, sup_ref):
    # support = x @ W for one row tile (MXU, f32 accumulation), stored bf16.
    sup_ref[...] = jnp.dot(
        x_ref[...], w_ref[...], preferred_element_type=jnp.float32
    ).astype(sup_ref.dtype)


def _adj_logsoftmax_kernel(adj_ref, sup_ref, b_ref, o_ref):
    # adj streamed as f32 (its native dtype: no wrapper-side cast pass over the
    # O(N^2) array); cast to the MXU compute dtype right before the dot.
    adj_c = adj_ref[...].astype(sup_ref.dtype)
    logits = jnp.dot(adj_c, sup_ref[...], preferred_element_type=jnp.float32)
    logits = logits + b_ref[...]  # padded class columns already hold -1e30 via bias
    # log_softmax along the class axis (torch dim=1); padded cols give exp(.)=0.
    m = jnp.max(logits, axis=-1, keepdims=True)
    shifted = logits - m
    lse = jnp.log(jnp.sum(jnp.exp(shifted), axis=-1, keepdims=True))
    o_ref[...] = (shifted - lse).astype(o_ref.dtype)


def gcn_one_hop(x, adj, weight, bias, *, tm=512, compute_dtype=jnp.bfloat16):
    N, nfeat = x.shape
    nclass = weight.shape[1]
    assert adj.shape == (N, N)
    assert bias.shape == (1, nclass)

    cd = jnp.dtype(compute_dtype)
    c_pad = _round_up(max(nclass, 1), 128)  # lane-dense class axis

    # --- small parameter padding / casts (O(N*nfeat), O(nfeat*nclass): cheap) ---
    x_c = x.astype(cd)
    w_c = jnp.pad(weight.astype(jnp.float32),
                  ((0, 0), (0, c_pad - nclass))).astype(cd)
    b_p = jnp.pad(bias.astype(jnp.float32), ((0, 0), (0, c_pad - nclass)),
                  constant_values=_NEG_INF)
    # NOTE: adj is intentionally left untouched (f32, unpadded) — no O(N^2)
    # wrapper pass.  Partial edge stripes are handled by the Pallas grid.

    # ---- generation-aware row-tile sizing (fits v7x 64 MiB as well as 128 MiB) ----
    vmem_cap = _vmem_capacity_bytes()
    budget = max(vmem_cap - (8 << 20), 16 << 20)

    def footprint(t):
        return (2 * t * N * 4        # double-buffered f32 adj row stripe (dominant)
                + t * N * 2          # in-kernel bf16 copy of the stripe
                + N * c_pad * 2      # resident bf16 support (single-buffered)
                + 2 * t * c_pad * 4  # double-buffered f32 output tile
                + 2 * c_pad * 4      # bias
                + (4 << 20))         # headroom for internal scratch

    if tm >= N:
        tm = N                                    # full-extent block: always legal
    else:
        tm = max(16, (tm // 16) * 16)             # bf16 packs (16,128) per vreg
    while tm > 16 and footprint(tm) > budget:
        nxt = max(16, ((tm // 2) // 16) * 16)
        if nxt >= N:
            nxt = N
        if nxt == tm:
            break
        tm = nxt
    grid_m = pl.cdiv(N, tm)

    vmem_limit = int(min(max(footprint(tm), 32 << 20), budget))

    # ---------------- kernel 1: support = x @ W (computed once) ----------------
    support = pl.pallas_call(
        _xw_kernel,
        out_shape=jax.ShapeDtypeStruct((N, c_pad), cd),
        grid_spec=pltpu.PrefetchScalarGridSpec(
            num_scalar_prefetch=0,
            grid=(grid_m,),
            in_specs=[
                _bspec((tm, nfeat), lambda i: (i, 0)),               # x tile (streamed)
                _bspec((nfeat, c_pad), lambda i: (0, 0), buffers=1),  # W (resident)
            ],
            out_specs=pl.BlockSpec((tm, c_pad), lambda i: (i, 0)),
        ),
        compiler_params=pltpu.CompilerParams(
            dimension_semantics=("parallel",),
        ),
        cost_estimate=pl.CostEstimate(
            flops=2 * N * nfeat * c_pad,
            transcendentals=0,
            bytes_accessed=int(N * nfeat * 2 + nfeat * c_pad * 2 + N * c_pad * 2),
        ),
    )(x_c, w_c)

    # ------------- kernel 2: adj @ support + bias, then log_softmax -------------
    out_pad = pl.pallas_call(
        _adj_logsoftmax_kernel,
        out_shape=jax.ShapeDtypeStruct((N, c_pad), jnp.float32),
        grid_spec=pltpu.PrefetchScalarGridSpec(
            num_scalar_prefetch=0,
            grid=(grid_m,),
            in_specs=[
                _bspec((tm, N), lambda i: (i, 0)),                   # adj stripe (f32, streamed)
                _bspec((N, c_pad), lambda i: (0, 0), buffers=1),     # support (resident)
                _bspec((1, c_pad), lambda i: (0, 0), buffers=1),     # bias (resident)
            ],
            out_specs=pl.BlockSpec((tm, c_pad), lambda i: (i, 0)),
        ),
        compiler_params=pltpu.CompilerParams(
            dimension_semantics=("parallel",),   # lets v7x shard row stripes over 2 TCs
            vmem_limit_bytes=vmem_limit,
        ),
        cost_estimate=pl.CostEstimate(
            flops=2 * N * N * c_pad,
            transcendentals=N * c_pad,
            bytes_accessed=int(N * N * 4 + N * c_pad * 2 + c_pad * 4
                               + N * c_pad * 4),
        ),
    )(adj, support, b_p)

    # Drop the masked padded class columns.
    return out_pad[:, :nclass]


if __name__ == "__main__":
    key = jax.random.PRNGKey(0)
    k_x, k_adj, k_w, k_b = jax.random.split(key, 4)

    # Small synthetic graph: N nodes, nfeat input features, nclass classes.
    N, nfeat, nclass = 64, 32, 8

    x = jax.random.normal(k_x, (N, nfeat), dtype=jnp.float32)

    # Dense symmetric normalized adjacency with self-loops (standard GCN preprocessing).
    a = (jax.random.uniform(k_adj, (N, N)) > 0.8).astype(jnp.float32)
    a = jnp.maximum(a, a.T) + jnp.eye(N, dtype=jnp.float32)
    deg = jnp.sum(a, axis=1)
    d_inv_sqrt = 1.0 / jnp.sqrt(deg)
    adj = a * d_inv_sqrt[:, None] * d_inv_sqrt[None, :]

    # GraphConvolution parameter init (Kipf: uniform(-1/sqrt(nclass), 1/sqrt(nclass))).
    stdv = 1.0 / jnp.sqrt(jnp.float32(nclass))
    weight = jax.random.uniform(k_w, (nfeat, nclass), minval=-stdv, maxval=stdv,
                                dtype=jnp.float32)
    bias = jax.random.uniform(k_b, (1, nclass), minval=-stdv, maxval=stdv,
                              dtype=jnp.float32)

    out = gcn_one_hop(x, adj, weight, bias)
    out = jax.block_until_ready(out)

    # Reference check in plain JAX (same math, full f32). Kernel feeds bf16 to the
    # MXU dots (f32 accumulation), so compare with a bf16-level tolerance.
    ref = jax.nn.log_softmax(adj @ (x @ weight) + bias, axis=1)
    assert out.shape == (N, nclass)
    assert jnp.allclose(out, ref, atol=5e-2, rtol=5e-2), \
        float(jnp.max(jnp.abs(out - ref)))

    print("KERNEL_OK")
</pallas_src>

<mosaic_0001>
module attributes {stable_mosaic.version = 11 : i64} {
  func.func @_xw_kernel(%arg0: i32, %arg1: memref<64x32xbf16, #tpu.memory_space<vmem>>, %arg2: memref<32x128xbf16, #tpu.memory_space<vmem>>, %arg3: memref<64x128xbf16, #tpu.memory_space<vmem>>) attributes {dimension_semantics = [#tpu.dimension_semantics<parallel>], iteration_bounds = array<i64: 1>, scalar_prefetch = 0 : i64, scratch_operands = 0 : i64, tpu.core_type = #tpu.core_type<tc>, window_params = [{transform_indices = @transform_0, window_bounds = array<i64: 64, 32>}, {pipeline_mode = #tpu.pipeline_mode<synchronous>, transform_indices = @transform_1, window_bounds = array<i64: 32, 128>}, {transform_indices = @transform_2, window_bounds = array<i64: 64, 128>}]} {
    %c0 = arith.constant 0 : index
    %c0_0 = arith.constant 0 : index
    %0 = vector.load %arg1[%c0, %c0_0] : memref<64x32xbf16, #tpu.memory_space<vmem>>, vector<64x32xbf16>
    %c0_1 = arith.constant 0 : index
    %c0_2 = arith.constant 0 : index
    %1 = vector.load %arg2[%c0_1, %c0_2] : memref<32x128xbf16, #tpu.memory_space<vmem>>, vector<32x128xbf16>
    %cst = arith.constant dense<0.000000e+00> : vector<64x128xf32>
    %2 = tpu.matmul %0, %1, %cst {dimension_numbers = #tpu.dot_dimension_numbers<[1], [0], [0], [1], [0, 0, 1, 1], [], []>} : vector<64x32xbf16>, vector<32x128xbf16>, vector<64x128xf32> -> vector<64x128xf32>
    %3 = arith.truncf %2 : vector<64x128xf32> to vector<64x128xbf16>
    %c0_3 = arith.constant 0 : index
    %c0_4 = arith.constant 0 : index
    %4 = vector.load %arg3[%c0_3, %c0_4] : memref<64x128xbf16, #tpu.memory_space<vmem>>, vector<64x128xbf16>
    tpu.vector_store %arg3[%c0_3, %c0_4], %3 {strides = array<i32>} : memref<64x128xbf16, #tpu.memory_space<vmem>>, vector<64x128xbf16>,
    return
  }
  func.func @transform_0(%arg0: i32) -> (i32, i32) {
    %c0_i32 = arith.constant 0 : i32
    %c0_i32_0 = arith.constant 0 : i32
    return %arg0, %c0_i32 : i32, i32
  }
  func.func @transform_1(%arg0: i32) -> (i32, i32) {
    %c0_i32 = arith.constant 0 : i32
    %c0_i32_0 = arith.constant 0 : i32
    %c0_i32_1 = arith.constant 0 : i32
    return %c0_i32, %c0_i32_0 : i32, i32
  }
  func.func @transform_2(%arg0: i32) -> (i32, i32) {
    %c0_i32 = arith.constant 0 : i32
    %c0_i32_0 = arith.constant 0 : i32
    return %arg0, %c0_i32 : i32, i32
  }
}

</mosaic_0001>

<llo_original>
// kernel: tpu_custom_call.1
$region0: #{tpu_custom_call.1}
  #allocation0 [shape = 'u32[]', space=smem, size = 0x4, offset = 0x4, fixed_abs, tag = 'smem constant byte address 0x4 - core index']
  #allocation1 [shape = 'u32[144,128]{1,0:T(1,128)}', space=vmem, size = 0x12000, scoped, tag = 'internal scratch']
  %s0 = inlined_call_operand.vmem [shape: bf16[64,32], index: 0, kind: input, shape index: {}]
  %s1 = inlined_call_operand.vmem [shape: bf16[32,128], index: 1, kind: input, shape index: {}]
  %s2 = inlined_call_operand.hbm [shape: bf16[64,128], index: 2, kind: output, shape index: {}]
  %s3 = sld [smem:[#allocation0]]
  $region18: #{tpu_custom_call.1} parent=0
    _
  %s5 = ssub.s32 1, %s3
  %s6 = scalar_select 0, %s5, %s3
  $region1: #{tpu_custom_call.1} parent=0
    #allocation2 [shape = 'u8[16384]{0}', space=vmem, size = 0x4000, scoped, tag = 'output window, operand 0, single buffered']
    #allocation3 [shape = 's32[1]{0}', space=sflag, size = 0x4, scoped, tag = 'scoped memory for tpu_custom_call.1']
    %7 = vsyncpa [#allocation3], 0
    // Predicated region
    $region2: #{tpu_custom_call.1} parent=1 // pred_check
      _
    $region3: #{tpu_custom_call.1} parent=1 // pred_check_branch
      %9 = sbr.rel (0) target = $region5
    $region4: #{tpu_custom_call.1} parent=1 // pred_region
      _
    $region5: #{tpu_custom_call.1} parent=1 // pred_fallthru
      _
    // Predicated region
    $region6: #{tpu_custom_call.1} parent=1 // pred_check
      _
    $region7: #{tpu_custom_call.1} parent=1 // pred_check_branch
      %11 = sbr.rel (0) target = $region9
    $region8: #{tpu_custom_call.1} parent=1 // pred_region
      _
    $region9: #{tpu_custom_call.1} parent=1 // pred_fallthru
      _
    %v13 = vld [vmem:[%s0] sm:$0xf]
    %v14 = vld [vmem:[%s0 + $0x4] sm:$0xf]
    %v15 = vld [vmem:[%s0 + $0x8] sm:$0xf]
    %v16 = vld [vmem:[%s0 + $0xc] sm:$0xf]
    %v17 = vld [vmem:[%s0 + $0x10] sm:$0xf]
    %v18 = vld [vmem:[%s0 + $0x14] sm:$0xf]
    %v19 = vld [vmem:[%s0 + $0x18] sm:$0xf]
    %v20 = vld [vmem:[%s0 + $0x1c] sm:$0xf]
    %v21 = vld [vmem:[%s1] sm:$0xf]
    %v22 = vld [vmem:[%s1 + $0x4] sm:$0xf]
    %v23 = vld [vmem:[%s1 + $0x8] sm:$0xf]
    %v24 = vld [vmem:[%s1 + $0xc] sm:$0xf]
    %v33 = vunpack.c.l.b16 %v13
    %v34 = vunpack.c.l.b16 %v14
    %v35 = vunpack.c.l.b16 %v15
    %v36 = vunpack.c.l.b16 %v16
    %v37 = vunpack.c.l.b16 %v17
    %v38 = vunpack.c.l.b16 %v18
    %v39 = vunpack.c.l.b16 %v19
    %v40 = vunpack.c.l.b16 %v20
    %v41 = vpack.c.b16 %v34, %v33
    %v42 = vpack.c.b16 %v36, %v35
    %v43 = vpack.c.b16 %v38, %v37
    %v44 = vpack.c.b16 %v40, %v39
    %v49 = vunpack.c.l.b16 %v21
    %v50 = vunpack.c.l.b16 %v22
    %v51 = vunpack.c.l.b16 %v23
    %v52 = vunpack.c.l.b16 %v24
    %v53 = vpack.c.b16 %v50, %v49
    %v54 = vpack.c.b16 %v52, %v51
    %vm57 = vcmask 261120
    %v59 = vsel %vm57, %v41, 0
    %v62 = vsel %vm57, %v42, 0
    %v65 = vsel %vm57, %v43, 0
    %v68 = vsel %vm57, %v44, 0
    %70 = vmatprep.subr.bf16.mxu0 0
    %71 = vmatpush1.bf16.msra.mxu0 %v53
    %72 = vmatprep.subr.bf16.mxu0 0
    %73 = vmatpush1.bf16.msra.mxu0 %v54
    %74 = vmatprep.subr.bf16.mxu0 0
    %75 = vmatpush1.bf16.msra.mxu0 0
    %76 = vmatprep.subr.bf16.mxu0 0
    %77 = vmatpush1.bf16.msra.mxu0 0
    %78 = vmatprep.subr.bf16.mxu0 0
    %79 = vmatpush1.bf16.msra.mxu0 0
    %80 = vmatprep.subr.bf16.mxu0 0
    %81 = vmatpush1.bf16.msra.mxu0 0
    %82 = vmatprep.subr.bf16.mxu0 0
    %83 = vmatpush1.bf16.msra.mxu0 0
    %84 = vmatprep.subr.bf16.mxu0 0
    %85 = vmatpush1.bf16.msra.mxu0 0
    %86 = vmatprep.subr.bf16.mxu0 0
    %87 = vmatpush1.bf16.msra.mxu0 0
    %88 = vmatprep.subr.bf16.mxu0 0
    %89 = vmatpush1.bf16.msra.mxu0 0
    %90 = vmatprep.subr.bf16.mxu0 0
    %91 = vmatpush1.bf16.msra.mxu0 0
    %92 = vmatprep.subr.bf16.mxu0 0
    %93 = vmatpush1.bf16.msra.mxu0 0
    %94 = vmatprep.subr.bf16.mxu0 0
    %95 = vmatpush1.bf16.msra.mxu0 0
    %96 = vmatprep.subr.bf16.mxu0 0
    %97 = vmatpush1.bf16.msra.mxu0 0
    %98 = vmatprep.subr.bf16.mxu0 0
    %99 = vmatpush1.bf16.msra.mxu0 0
    %100 = vmatprep.subr.bf16.mxu0 0
    %101 = vmatpush1.bf16.msra.mxu0 0
    %102 = vmatprep.mubr.bf16.mxu0 0
    %103 = vmatmul.mubr.bf16.gmra.mrb[0].mxu0 %v59
    %v104 = vpop.f32.mrb[0].mxu0
    %v105 = vadd.f32 0.0, %v104
    %v106 = vpop.f32.mrb[0].mxu0
    %v107 = vpop.f32.mrb[0].mxu0
    %v108 = vadd.f32 0.0, %v107
    %v109 = vpop.f32.mrb[0].mxu0
    %110 = vmatprep.mubr.bf16.mxu0 0
    %111 = vmatmul.mubr.bf16.gmra.mrb[0].mxu0 %v62
    %v112 = vpop.f32.mrb[0].mxu0
    %v113 = vadd.f32 0.0, %v112
    %v114 = vpop.f32.mrb[0].mxu0
    %v115 = vpop.f32.mrb[0].mxu0
    %v116 = vadd.f32 0.0, %v115
    %v117 = vpop.f32.mrb[0].mxu0
    %118 = vmatprep.mubr.bf16.mxu0 0
    %119 = vmatmul.mubr.bf16.gmra.mrb[0].mxu0 %v65
    %v120 = vpop.f32.mrb[0].mxu0
    %v121 = vadd.f32 0.0, %v120
    %v122 = vpop.f32.mrb[0].mxu0
    %v123 = vpop.f32.mrb[0].mxu0
    %v124 = vadd.f32 0.0, %v123
    %v125 = vpop.f32.mrb[0].mxu0
    %126 = vmatprep.mubr.bf16.mxu0 0
    %127 = vmatmul.mubr.bf16.gmra.mrb[0].mxu0 %v68
    %v128 = vpop.f32.mrb[0].mxu0
    %v129 = vadd.f32 0.0, %v128
    %v130 = vpop.f32.mrb[0].mxu0
    %v131 = vpop.f32.mrb[0].mxu0
    %v132 = vadd.f32 0.0, %v131
    %v133 = vpop.f32.mrb[0].mxu0
    %134 = vdwg.mxu0
    %v135 = vpack.c.bf16 %v108, %v105
    %v136 = vpack.c.bf16 %v116, %v113
    %v137 = vpack.c.bf16 %v124, %v121
    %v138 = vpack.c.bf16 %v132, %v129
    %v143 = vunpack.c.l.b16 %v135
    %v144 = vunpack.c.h.b16 %v135
    %v145 = vunpack.c.l.b16 %v136
    %v146 = vunpack.c.h.b16 %v136
    %v147 = vunpack.c.l.b16 %v137
    %v148 = vunpack.c.h.b16 %v137
    %v149 = vunpack.c.l.b16 %v138
    %v150 = vunpack.c.h.b16 %v138
    %v151 = vpack.c.b16 %v143, %v143
    %v152 = vpack.c.b16 %v144, %v144
    %v153 = vpack.c.b16 %v145, %v145
    %v154 = vpack.c.b16 %v146, %v146
    %v155 = vpack.c.b16 %v147, %v147
    %v156 = vpack.c.b16 %v148, %v148
    %v157 = vpack.c.b16 %v149, %v149
    %v158 = vpack.c.b16 %v150, %v150
    %167 = vst [vmem:[#allocation2] sm:$0xf] %v151
    %168 = vst [vmem:[#allocation2 + $0x4] sm:$0xf] %v152
    %169 = vst [vmem:[#allocation2 + $0x8] sm:$0xf] %v153
    %170 = vst [vmem:[#allocation2 + $0xc] sm:$0xf] %v154
    %171 = vst [vmem:[#allocation2 + $0x10] sm:$0xf] %v155
    %172 = vst [vmem:[#allocation2 + $0x14] sm:$0xf] %v156
    %173 = vst [vmem:[#allocation2 + $0x18] sm:$0xf] %v157
    %174 = vst [vmem:[#allocation2 + $0x1c] sm:$0xf] %v158
    // Predicated region
    $region10: #{tpu_custom_call.1} parent=1 // pred_check
      _
    $region11: #{tpu_custom_call.1} parent=1 // pred_check_branch
      %176 = sbr.rel (0) target = $region13
    $region12: #{tpu_custom_call.1} parent=1 // pred_region
      %s178 = ssub.s32 512, 512
      %179 = vsyncadd [#allocation3], %s178
      %s180 = sshll.u32 [#allocation2], 4
      %s181 = int_to_ptr.vmem [resolvable:$true] %s180
      %186 = dma.vmem_to_hbm [thread:$0]  %s181, 512, %s2, [#allocation3], 64, 64, 4
    $region13: #{tpu_custom_call.1} parent=1 // pred_fallthru
      _
    // Predicated region
    $region14: #{tpu_custom_call.1} parent=1 // pred_check
      _
    $region15: #{tpu_custom_call.1} parent=1 // pred_check_branch
      %188 = sbr.rel (0) target = $region17
    $region16: #{tpu_custom_call.1} parent=1 // pred_region
      %189 = dma.done [#allocation3], 512
    $region17: #{tpu_custom_call.1} parent=1 // pred_fallthru
      _
    %190 = vsyncpa [#allocation3], 1

</llo_original>
